<compile_context>
chip_gen: v6e
topology: v6e:2x2x1
jax: 0.10.0
libtpu: 0.0.40
codegen_flags: <defaults>
</compile_context>

<pallas_src>
import jax
import jax.numpy as jnp
from jax.experimental import pallas as pl
from jax.experimental.pallas import tpu as pltpu

LANE = 128
SUBLANE = 8


def _round_up(n, m):
    return ((n + m - 1) // m) * m


def _make_network_kernel(num_layers):
    """Whole-network fused kernel: refs = (x, *(5 params per layer), out)."""

    def kernel(*refs):
        x_ref, o_ref = refs[0], refs[-1]
        p = refs[1:-1]
        out = x_ref[...]                                       # (tile, Din)
        for i in range(num_layers):
            ct_m2, c2, nisg, w, b = p[5 * i:5 * (i + 1)]
            # squared distance via ||x||^2 + ||c||^2 - 2 x.c ; the -2 is
            # already folded into ct_m2, the x.c term runs on the MXU.
            x2 = jnp.sum(out * out, axis=-1, keepdims=True)    # (tile, 1)
            xc = jnp.dot(out, ct_m2[...],
                         preferred_element_type=jnp.float32)   # (tile, Cp)
            sq = jnp.maximum(x2 + c2[...] + xc, 0.0)           # (tile, Cp)
            phi = jnp.exp(sq * nisg[...])                      # gaussian RBF (EUP)
            out = jnp.dot(phi, w[...],
                          preferred_element_type=jnp.float32) + b[...]
        o_ref[...] = out.astype(o_ref.dtype)

    return kernel


def init_network_params(key, layer_widths, layer_centres):
    """Raw parameters mirroring the PyTorch module's shapes.

    RBF:    centres ~ N(0, 1), log_sigmas = 0
    Linear: weight/bias ~ U(-1/sqrt(fan_in), 1/sqrt(fan_in))  (torch default)
    """
    params = []
    for i in range(len(layer_widths) - 1):
        din, c, dout = layer_widths[i], layer_centres[i], layer_widths[i + 1]
        key, k_ctr, k_w, k_b = jax.random.split(key, 4)
        centres = jax.random.normal(k_ctr, (c, din), jnp.float32)
        log_sigmas = jnp.zeros((c,), jnp.float32)
        bound = 1.0 / jnp.sqrt(jnp.float32(c))
        weight = jax.random.uniform(k_w, (dout, c), jnp.float32, -bound, bound)
        bias = jax.random.uniform(k_b, (dout,), jnp.float32, -bound, bound)
        params.append((centres, log_sigmas, weight, bias))
    return params


def prepare_kernel_params(params):
    """One-time layout folding + lane padding so forward() does zero reformat work."""
    kparams = []
    din_pad = params[0][0].shape[1]        # first layer keeps the natural input width
    dout_pad = dout = None
    for (centres, log_sigmas, weight, bias) in params:
        c, din = centres.shape
        dout = weight.shape[0]
        cp = _round_up(c, LANE)
        dout_pad = _round_up(dout, LANE)
        # -2 * centres^T, zero-padded to (din_pad, Cp).
        ct_m2 = jnp.zeros((din_pad, cp), jnp.float32)
        ct_m2 = ct_m2.at[:din, :c].set(-2.0 * centres.T)
        # ||centre||^2 per centre (padded -> 0).
        c2 = jnp.zeros((1, cp), jnp.float32)
        c2 = c2.at[:, :c].set(jnp.sum(centres * centres, axis=1)[None, :])
        # -1/sigma^2 = -exp(-2*log_sigma); padded centres -> 0 -> phi=1, but
        # their weight rows below are zero, so the output is exact.
        nisg = jnp.zeros((1, cp), jnp.float32)
        nisg = nisg.at[:, :c].set(-jnp.exp(-2.0 * log_sigmas)[None, :])
        # weight^T zero-padded to (Cp, Dp); padded Dout columns stay zero so the
        # next layer's padded input columns are exactly zero.
        wt = jnp.zeros((cp, dout_pad), jnp.float32)
        wt = wt.at[:c, :dout].set(weight.T)
        b2 = jnp.zeros((1, dout_pad), jnp.float32)
        b2 = b2.at[:, :dout].set(bias[None, :])
        kparams.extend([ct_m2, c2, nisg, wt, b2])
        din_pad = dout_pad                 # next layer's (padded) input width
    return kparams, dout_pad, dout          # final padded / true output widths


def build_network_forward(kparams, num_layers, dout_pad, dout):
    kernel = _make_network_kernel(num_layers)
    # Parameters: full arrays, same block for every grid step (stay resident).
    param_specs = [pl.BlockSpec(kp.shape, lambda i: (0, 0)) for kp in kparams]

    @jax.jit
    def forward(x):
        n, din = x.shape
        if n <= LANE:
            n_pad = _round_up(n, SUBLANE)
            tile = n_pad                   # single grid step, no batch padding waste
        else:
            n_pad = _round_up(n, LANE)
            tile = LANE                    # pipeline batch tiles; "parallel" on v7x
        xp = x if n_pad == n else jnp.pad(x, ((0, n_pad - n), (0, 0)))
        out = pl.pallas_call(
            kernel,
            out_shape=jax.ShapeDtypeStruct((n_pad, dout_pad), x.dtype),
            grid=(n_pad // tile,),
            in_specs=[pl.BlockSpec((tile, din), lambda i: (i, 0))] + param_specs,
            out_specs=pl.BlockSpec((tile, dout_pad), lambda i: (i, 0)),
            compiler_params=pltpu.CompilerParams(
                dimension_semantics=("parallel",)),
        )(xp, *kparams)
        return out[:n, :dout]

    return forward


def _reference_forward(params, x):
    """Pure-JAX reference: exactly the PyTorch module's math (sqrt/divide form)."""
    ref = x
    for (centres, log_sigmas, weight, bias) in params:
        diff = ref[:, None, :] - centres[None, :, :]
        dist = jnp.sqrt(jnp.sum(diff * diff, axis=-1)) / jnp.exp(log_sigmas)[None, :]
        phi = jnp.exp(-(dist ** 2))
        ref = phi @ weight.T + bias
    return ref


if __name__ == "__main__":
    key = jax.random.PRNGKey(0)

    # Network(layer_widths=[4, 8, 2], layer_centres=[16, 8], basis_func=gaussian)
    layer_widths = [4, 8, 2]
    layer_centres = [16, 8]

    k_params, k_x1, k_x2 = jax.random.split(key, 3)
    params = init_network_params(k_params, layer_widths, layer_centres)
    kparams, dout_pad, dout = prepare_kernel_params(params)
    forward = build_network_forward(kparams, len(params), dout_pad, dout)

    # Small batch (single grid step).
    x_small = jax.random.normal(k_x1, (8, layer_widths[0]), jnp.float32)
    out_small = forward(x_small)
    jax.block_until_ready(out_small)
    assert out_small.shape == (8, layer_widths[-1])
    ref_small = _reference_forward(params, x_small)
    err_small = float(jnp.max(jnp.abs(out_small - ref_small)))
    assert jnp.allclose(out_small, ref_small, atol=2e-5, rtol=1e-5), err_small

    # Larger ragged batch (exercises the tiled "parallel" grid + padding path).
    x_big = jax.random.normal(k_x2, (300, layer_widths[0]), jnp.float32)
    out_big = forward(x_big)
    jax.block_until_ready(out_big)
    assert out_big.shape == (300, layer_widths[-1])
    ref_big = _reference_forward(params, x_big)
    err_big = float(jnp.max(jnp.abs(out_big - ref_big)))
    assert jnp.allclose(out_big, ref_big, atol=2e-5, rtol=1e-5), err_big

    print("KERNEL_OK")
</pallas_src>

<mosaic_0001>
module attributes {stable_mosaic.version = 11 : i64} {
  func.func @kernel(%arg0: i32, %arg1: memref<8x4xf32, #tpu.memory_space<vmem>>, %arg2: memref<4x128xf32, #tpu.memory_space<vmem>>, %arg3: memref<1x128xf32, #tpu.memory_space<vmem>>, %arg4: memref<1x128xf32, #tpu.memory_space<vmem>>, %arg5: memref<128x128xf32, #tpu.memory_space<vmem>>, %arg6: memref<1x128xf32, #tpu.memory_space<vmem>>, %arg7: memref<128x128xf32, #tpu.memory_space<vmem>>, %arg8: memref<1x128xf32, #tpu.memory_space<vmem>>, %arg9: memref<1x128xf32, #tpu.memory_space<vmem>>, %arg10: memref<128x128xf32, #tpu.memory_space<vmem>>, %arg11: memref<1x128xf32, #tpu.memory_space<vmem>>, %arg12: memref<8x128xf32, #tpu.memory_space<vmem>>) attributes {dimension_semantics = [#tpu.dimension_semantics<parallel>], iteration_bounds = array<i64: 1>, scalar_prefetch = 0 : i64, scratch_operands = 0 : i64, tpu.core_type = #tpu.core_type<tc>, window_params = [{transform_indices = @transform_0, window_bounds = array<i64: 8, 4>}, {pipeline_mode = #tpu.pipeline_mode<synchronous>, transform_indices = @transform_1, window_bounds = array<i64: 4, 128>}, {pipeline_mode = #tpu.pipeline_mode<synchronous>, transform_indices = @transform_2, window_bounds = array<i64: 1, 128>}, {pipeline_mode = #tpu.pipeline_mode<synchronous>, transform_indices = @transform_3, window_bounds = array<i64: 1, 128>}, {pipeline_mode = #tpu.pipeline_mode<synchronous>, transform_indices = @transform_4, window_bounds = array<i64: 128, 128>}, {pipeline_mode = #tpu.pipeline_mode<synchronous>, transform_indices = @transform_5, window_bounds = array<i64: 1, 128>}, {pipeline_mode = #tpu.pipeline_mode<synchronous>, transform_indices = @transform_6, window_bounds = array<i64: 128, 128>}, {pipeline_mode = #tpu.pipeline_mode<synchronous>, transform_indices = @transform_7, window_bounds = array<i64: 1, 128>}, {pipeline_mode = #tpu.pipeline_mode<synchronous>, transform_indices = @transform_8, window_bounds = array<i64: 1, 128>}, {pipeline_mode = #tpu.pipeline_mode<synchronous>, transform_indices = @transform_9, window_bounds = array<i64: 128, 128>}, {pipeline_mode = #tpu.pipeline_mode<synchronous>, transform_indices = @transform_10, window_bounds = array<i64: 1, 128>}, {transform_indices = @transform_11, window_bounds = array<i64: 8, 128>}]} {
    %c0 = arith.constant 0 : index
    %c0_0 = arith.constant 0 : index
    %0 = vector.load %arg1[%c0, %c0_0] : memref<8x4xf32, #tpu.memory_space<vmem>>, vector<8x4xf32>
    %1 = arith.mulf %0, %0 : vector<8x4xf32>
    %cst = arith.constant dense<0.000000e+00> : vector<8xf32>
    %2 = vector.multi_reduction <add>, %1, %cst [1] : vector<8x4xf32> to vector<8xf32>
    %3 = vector.shape_cast %2 : vector<8xf32> to vector<8x1xf32>
    %c0_1 = arith.constant 0 : index
    %c0_2 = arith.constant 0 : index
    %4 = vector.load %arg2[%c0_1, %c0_2] : memref<4x128xf32, #tpu.memory_space<vmem>>, vector<4x128xf32>
    %cst_3 = arith.constant dense<0.000000e+00> : vector<8x128xf32>
    %5 = tpu.matmul %0, %4, %cst_3 {dimension_numbers = #tpu.dot_dimension_numbers<[1], [0], [0], [1], [0, 0, 1, 1], [], []>} : vector<8x4xf32>, vector<4x128xf32>, vector<8x128xf32> -> vector<8x128xf32>
    %c0_4 = arith.constant 0 : index
    %c0_5 = arith.constant 0 : index
    %6 = vector.load %arg3[%c0_4, %c0_5] : memref<1x128xf32, #tpu.memory_space<vmem>>, vector<1x128xf32>
    %7 = vector.broadcast %3 : vector<8x1xf32> to vector<8x128xf32>
    %8 = vector.broadcast %6 : vector<1x128xf32> to vector<8x128xf32>
    %9 = arith.addf %7, %8 : vector<8x128xf32>
    %10 = arith.addf %9, %5 : vector<8x128xf32>
    %cst_6 = arith.constant 0.000000e+00 : f32
    %11 = vector.broadcast %cst_6 : f32 to vector<8x128xf32>
    %12 = arith.maximumf %10, %11 : vector<8x128xf32>
    %c0_7 = arith.constant 0 : index
    %c0_8 = arith.constant 0 : index
    %13 = vector.load %arg4[%c0_7, %c0_8] : memref<1x128xf32, #tpu.memory_space<vmem>>, vector<1x128xf32>
    %14 = vector.broadcast %13 : vector<1x128xf32> to vector<8x128xf32>
    %15 = arith.mulf %12, %14 : vector<8x128xf32>
    %16 = math.exp %15 : vector<8x128xf32>
    %c0_9 = arith.constant 0 : index
    %c0_10 = arith.constant 0 : index
    %17 = vector.load %arg5[%c0_9, %c0_10] : memref<128x128xf32, #tpu.memory_space<vmem>>, vector<128x128xf32>
    %cst_11 = arith.constant dense<0.000000e+00> : vector<8x128xf32>
    %18 = tpu.matmul %16, %17, %cst_11 {dimension_numbers = #tpu.dot_dimension_numbers<[1], [0], [0], [1], [0, 0, 1, 1], [], []>} : vector<8x128xf32>, vector<128x128xf32>, vector<8x128xf32> -> vector<8x128xf32>
    %c0_12 = arith.constant 0 : index
    %c0_13 = arith.constant 0 : index
    %19 = vector.load %arg6[%c0_12, %c0_13] : memref<1x128xf32, #tpu.memory_space<vmem>>, vector<1x128xf32>
    %20 = vector.broadcast %19 : vector<1x128xf32> to vector<8x128xf32>
    %21 = arith.addf %18, %20 : vector<8x128xf32>
    %22 = arith.mulf %21, %21 : vector<8x128xf32>
    %cst_14 = arith.constant dense<0.000000e+00> : vector<8xf32>
    %23 = vector.multi_reduction <add>, %22, %cst_14 [1] : vector<8x128xf32> to vector<8xf32>
    %24 = vector.shape_cast %23 : vector<8xf32> to vector<8x1xf32>
    %c0_15 = arith.constant 0 : index
    %c0_16 = arith.constant 0 : index
    %25 = vector.load %arg7[%c0_15, %c0_16] : memref<128x128xf32, #tpu.memory_space<vmem>>, vector<128x128xf32>
    %cst_17 = arith.constant dense<0.000000e+00> : vector<8x128xf32>
    %26 = tpu.matmul %21, %25, %cst_17 {dimension_numbers = #tpu.dot_dimension_numbers<[1], [0], [0], [1], [0, 0, 1, 1], [], []>} : vector<8x128xf32>, vector<128x128xf32>, vector<8x128xf32> -> vector<8x128xf32>
    %c0_18 = arith.constant 0 : index
    %c0_19 = arith.constant 0 : index
    %27 = vector.load %arg8[%c0_18, %c0_19] : memref<1x128xf32, #tpu.memory_space<vmem>>, vector<1x128xf32>
    %28 = vector.broadcast %24 : vector<8x1xf32> to vector<8x128xf32>
    %29 = vector.broadcast %27 : vector<1x128xf32> to vector<8x128xf32>
    %30 = arith.addf %28, %29 : vector<8x128xf32>
    %31 = arith.addf %30, %26 : vector<8x128xf32>
    %cst_20 = arith.constant 0.000000e+00 : f32
    %32 = vector.broadcast %cst_20 : f32 to vector<8x128xf32>
    %33 = arith.maximumf %31, %32 : vector<8x128xf32>
    %c0_21 = arith.constant 0 : index
    %c0_22 = arith.constant 0 : index
    %34 = vector.load %arg9[%c0_21, %c0_22] : memref<1x128xf32, #tpu.memory_space<vmem>>, vector<1x128xf32>
    %35 = vector.broadcast %34 : vector<1x128xf32> to vector<8x128xf32>
    %36 = arith.mulf %33, %35 : vector<8x128xf32>
    %37 = math.exp %36 : vector<8x128xf32>
    %c0_23 = arith.constant 0 : index
    %c0_24 = arith.constant 0 : index
    %38 = vector.load %arg10[%c0_23, %c0_24] : memref<128x128xf32, #tpu.memory_space<vmem>>, vector<128x128xf32>
    %cst_25 = arith.constant dense<0.000000e+00> : vector<8x128xf32>
    %39 = tpu.matmul %37, %38, %cst_25 {dimension_numbers = #tpu.dot_dimension_numbers<[1], [0], [0], [1], [0, 0, 1, 1], [], []>} : vector<8x128xf32>, vector<128x128xf32>, vector<8x128xf32> -> vector<8x128xf32>
    %c0_26 = arith.constant 0 : index
    %c0_27 = arith.constant 0 : index
    %40 = vector.load %arg11[%c0_26, %c0_27] : memref<1x128xf32, #tpu.memory_space<vmem>>, vector<1x128xf32>
    %41 = vector.broadcast %40 : vector<1x128xf32> to vector<8x128xf32>
    %42 = arith.addf %39, %41 : vector<8x128xf32>
    %c0_28 = arith.constant 0 : index
    %c0_29 = arith.constant 0 : index
    %43 = vector.load %arg12[%c0_28, %c0_29] : memref<8x128xf32, #tpu.memory_space<vmem>>, vector<8x128xf32>
    tpu.vector_store %arg12[%c0_28, %c0_29], %42 {strides = array<i32>} : memref<8x128xf32, #tpu.memory_space<vmem>>, vector<8x128xf32>,
    return
  }
  func.func @transform_0(%arg0: i32) -> (i32, i32) {
    %c0_i32 = arith.constant 0 : i32
    %c0_i32_0 = arith.constant 0 : i32
    return %arg0, %c0_i32 : i32, i32
  }
  func.func @transform_1(%arg0: i32) -> (i32, i32) {
    %c0_i32 = arith.constant 0 : i32
    %c0_i32_0 = arith.constant 0 : i32
    %c0_i32_1 = arith.constant 0 : i32
    return %c0_i32, %c0_i32_0 : i32, i32
  }
  func.func @transform_2(%arg0: i32) -> (i32, i32) {
    %c0_i32 = arith.constant 0 : i32
    %c0_i32_0 = arith.constant 0 : i32
    %c0_i32_1 = arith.constant 0 : i32
    return %c0_i32, %c0_i32_0 : i32, i32
  }
  func.func @transform_3(%arg0: i32) -> (i32, i32) {
    %c0_i32 = arith.constant 0 : i32
    %c0_i32_0 = arith.constant 0 : i32
    %c0_i32_1 = arith.constant 0 : i32
    return %c0_i32, %c0_i32_0 : i32, i32
  }
  func.func @transform_4(%arg0: i32) -> (i32, i32) {
    %c0_i32 = arith.constant 0 : i32
    %c0_i32_0 = arith.constant 0 : i32
    %c0_i32_1 = arith.constant 0 : i32
    return %c0_i32, %c0_i32_0 : i32, i32
  }
  func.func @transform_5(%arg0: i32) -> (i32, i32) {
    %c0_i32 = arith.constant 0 : i32
    %c0_i32_0 = arith.constant 0 : i32
    %c0_i32_1 = arith.constant 0 : i32
    return %c0_i32, %c0_i32_0 : i32, i32
  }
  func.func @transform_6(%arg0: i32) -> (i32, i32) {
    %c0_i32 = arith.constant 0 : i32
    %c0_i32_0 = arith.constant 0 : i32
    %c0_i32_1 = arith.constant 0 : i32
    return %c0_i32, %c0_i32_0 : i32, i32
  }
  func.func @transform_7(%arg0: i32) -> (i32, i32) {
    %c0_i32 = arith.constant 0 : i32
    %c0_i32_0 = arith.constant 0 : i32
    %c0_i32_1 = arith.constant 0 : i32
    return %c0_i32, %c0_i32_0 : i32, i32
  }
  func.func @transform_8(%arg0: i32) -> (i32, i32) {
    %c0_i32 = arith.constant 0 : i32
    %c0_i32_0 = arith.constant 0 : i32
    %c0_i32_1 = arith.constant 0 : i32
    return %c0_i32, %c0_i32_0 : i32, i32
  }
  func.func @transform_9(%arg0: i32) -> (i32, i32) {
    %c0_i32 = arith.constant 0 : i32
    %c0_i32_0 = arith.constant 0 : i32
    %c0_i32_1 = arith.constant 0 : i32
    return %c0_i32, %c0_i32_0 : i32, i32
  }
  func.func @transform_10(%arg0: i32) -> (i32, i32) {
    %c0_i32 = arith.constant 0 : i32
    %c0_i32_0 = arith.constant 0 : i32
    %c0_i32_1 = arith.constant 0 : i32
    return %c0_i32, %c0_i32_0 : i32, i32
  }
  func.func @transform_11(%arg0: i32) -> (i32, i32) {
    %c0_i32 = arith.constant 0 : i32
    %c0_i32_0 = arith.constant 0 : i32
    return %arg0, %c0_i32 : i32, i32
  }
}

</mosaic_0001>

<llo_original>
// kernel: forward.1
$region0: #{forward.1}
  #allocation0 [shape = 'u32[]', space=smem, size = 0x4, offset = 0x4, fixed_abs, tag = 'smem constant byte address 0x4 - core index']
  #allocation1 [shape = 'u32[144,128]{1,0:T(1,128)}', space=vmem, size = 0x12000, scoped, tag = 'internal scratch']
  %s0 = inlined_call_operand.vmem [shape: f32[8,4], index: 0, kind: input, shape index: {}]
  %s1 = inlined_call_operand.vmem [shape: f32[4,128], index: 1, kind: input, shape index: {}]
  %s2 = inlined_call_operand.vmem [shape: f32[1,128], index: 2, kind: input, shape index: {}]
  %s3 = inlined_call_operand.vmem [shape: f32[1,128], index: 3, kind: input, shape index: {}]
  %s4 = inlined_call_operand.hbm [shape: f32[128,128], index: 4, kind: input, shape index: {}]
  %s5 = inlined_call_operand.vmem [shape: f32[1,128], index: 5, kind: input, shape index: {}]
  %s6 = inlined_call_operand.hbm [shape: f32[128,128], index: 6, kind: input, shape index: {}]
  %s7 = inlined_call_operand.vmem [shape: f32[1,128], index: 7, kind: input, shape index: {}]
  %s8 = inlined_call_operand.vmem [shape: f32[1,128], index: 8, kind: input, shape index: {}]
  %s9 = inlined_call_operand.hbm [shape: f32[128,128], index: 9, kind: input, shape index: {}]
  %s10 = inlined_call_operand.vmem [shape: f32[1,128], index: 10, kind: input, shape index: {}]
  %s11 = inlined_call_operand.vmem [shape: f32[8,128], index: 11, kind: output, shape index: {}]
  %s12 = sld [smem:[#allocation0]]
  $region66: #{forward.1} parent=0
    _
  %s14 = ssub.s32 1, %s12
  %s15 = scalar_select 0, %s14, %s12
  $region1: #{forward.1} parent=0
    #allocation2 [shape = 'u8[65536]{0}', space=vmem, size = 0x10000, scoped, tag = 'input window, operand 4, single buffered']
    #allocation3 [shape = 's32[1]{0}', space=sflag, size = 0x4, scoped, tag = 'scoped memory for forward.1']
    #allocation4 [shape = 'u8[65536]{0}', space=vmem, size = 0x10000, scoped, tag = 'input window, operand 6, single buffered']
    #allocation5 [shape = 's32[1]{0}', space=sflag, size = 0x4, scoped, tag = 'scoped memory for forward.1']
    #allocation6 [shape = 'u8[65536]{0}', space=vmem, size = 0x10000, scoped, tag = 'input window, operand 9, single buffered']
    %16 = vsyncpa [#allocation3], 0
    %17 = vsyncpa [#allocation5], 0
    // Predicated region
    $region2: #{forward.1} parent=1 // pred_check
      _
    $region3: #{forward.1} parent=1 // pred_check_branch
      %19 = sbr.rel (0) target = $region5
    $region4: #{forward.1} parent=1 // pred_region
      _
    $region5: #{forward.1} parent=1 // pred_fallthru
      _
    // Predicated region
    $region6: #{forward.1} parent=1 // pred_check
      _
    $region7: #{forward.1} parent=1 // pred_check_branch
      %21 = sbr.rel (0) target = $region9
    $region8: #{forward.1} parent=1 // pred_region
      _
    $region9: #{forward.1} parent=1 // pred_fallthru
      _
    // Predicated region
    $region10: #{forward.1} parent=1 // pred_check
      _
    $region11: #{forward.1} parent=1 // pred_check_branch
      %23 = sbr.rel (0) target = $region13
    $region12: #{forward.1} parent=1 // pred_region
      _
    $region13: #{forward.1} parent=1 // pred_fallthru
      _
    // Predicated region
    $region14: #{forward.1} parent=1 // pred_check
      _
    $region15: #{forward.1} parent=1 // pred_check_branch
      %25 = sbr.rel (0) target = $region17
    $region16: #{forward.1} parent=1 // pred_region
      _
    $region17: #{forward.1} parent=1 // pred_fallthru
      _
    // Predicated region
    $region18: #{forward.1} parent=1 // pred_check
      _
    $region19: #{forward.1} parent=1 // pred_check_branch
      %27 = sbr.rel (0) target = $region21
    $region20: #{forward.1} parent=1 // pred_region
      %s29 = ssub.s32 2048, 2048
      %30 = vsyncadd [#allocation3], %s29
      %s31 = sshll.u32 [#allocation2], 4
      %s32 = int_to_ptr.vmem [resolvable:$true] %s31
      %37 = dma.hbm_to_vmem [thread:$0]  %s4, 2048, %s32, [#allocation3], 128, 128, 8
    $region21: #{forward.1} parent=1 // pred_fallthru
      _
    // Predicated region
    $region22: #{forward.1} parent=1 // pred_check
      _
    $region23: #{forward.1} parent=1 // pred_check_branch
      %39 = sbr.rel (0) target = $region25
    $region24: #{forward.1} parent=1 // pred_region
      _
    $region25: #{forward.1} parent=1 // pred_fallthru
      _
    // Predicated region
    $region26: #{forward.1} parent=1 // pred_check
      _
    $region27: #{forward.1} parent=1 // pred_check_branch
      %41 = sbr.rel (0) target = $region29
    $region28: #{forward.1} parent=1 // pred_region
      %s43 = ssub.s32 2048, 2048
      %44 = vsyncadd [#allocation5], %s43
      %s45 = sshll.u32 [#allocation4], 4
      %s46 = int_to_ptr.vmem [resolvable:$true] %s45
      %51 = dma.hbm_to_vmem [thread:$0]  %s6, 2048, %s46, [#allocation5], 128, 128, 8
    $region29: #{forward.1} parent=1 // pred_fallthru
      _
    // Predicated region
    $region30: #{forward.1} parent=1 // pred_check
      _
    $region31: #{forward.1} parent=1 // pred_check_branch
      %53 = sbr.rel (0) target = $region33
    $region32: #{forward.1} parent=1 // pred_region
      _
    $region33: #{forward.1} parent=1 // pred_fallthru
      _
    // Predicated region
    $region34: #{forward.1} parent=1 // pred_check
      _
    $region35: #{forward.1} parent=1 // pred_check_branch
      %55 = sbr.rel (0) target = $region37
    $region36: #{forward.1} parent=1 // pred_region
      _
    $region37: #{forward.1} parent=1 // pred_fallthru
      _
    // Predicated region
    $region38: #{forward.1} parent=1 // pred_check
      _
    $region39: #{forward.1} parent=1 // pred_check_branch
      %57 = sbr.rel (0) target = $region41
    $region40: #{forward.1} parent=1 // pred_region
      %s59 = ssub.s32 2048, 2048
      %60 = vsyncadd [#allocation5], %s59
      %s61 = sshll.u32 [#allocation6], 4
      %s62 = int_to_ptr.vmem [resolvable:$true] %s61
      %67 = dma.hbm_to_vmem [thread:$0]  %s9, 2048, %s62, [#allocation5], 128, 128, 8
    $region41: #{forward.1} parent=1 // pred_fallthru
      _
    // Predicated region
    $region42: #{forward.1} parent=1 // pred_check
      _
    $region43: #{forward.1} parent=1 // pred_check_branch
      %69 = sbr.rel (0) target = $region45
    $region44: #{forward.1} parent=1 // pred_region
      _
    $region45: #{forward.1} parent=1 // pred_fallthru
      _
    // Predicated region
    $region46: #{forward.1} parent=1 // pred_check
      _
    $region47: #{forward.1} parent=1 // pred_check_branch
      %71 = sbr.rel (0) target = $region49
    $region48: #{forward.1} parent=1 // pred_region
      %72 = dma.done [#allocation3], 2048
    $region49: #{forward.1} parent=1 // pred_fallthru
      _
    // Predicated region
    $region50: #{forward.1} parent=1 // pred_check
      _
    $region51: #{forward.1} parent=1 // pred_check_branch
      %74 = sbr.rel (0) target = $region53
    $region52: #{forward.1} parent=1 // pred_region
      %75 = dma.done [#allocation5], 2048
    $region53: #{forward.1} parent=1 // pred_fallthru
      _
    // Predicated region
    $region54: #{forward.1} parent=1 // pred_check
      _
    $region55: #{forward.1} parent=1 // pred_check_branch
      %77 = sbr.rel (0) target = $region57
    $region56: #{forward.1} parent=1 // pred_region
      %78 = dma.done [#allocation5], 2048
    $region57: #{forward.1} parent=1 // pred_fallthru
      _
    %v79 = vld [vmem:[%s0] sm:$0xff]
    %v80 = vmul.f32 %v79, %v79
    %vm81 = vcmask 31744
    %v82 = vsel %vm81, %v80, 0.0
    %83 = vadd.xlane.f32.xlu0 %v82
    %v84 = vpop.xlane.xlu0 %83
    %v85 = vld [vmem:[%s1] sm:$0xf]
    %v87 = vsel %vm81, %v79, 0
    %vm89 = vcmask 1043456
    %v91 = vsel %vm89, %v85, 0
    %93 = vmatprep.subr.mxu0 0.0
    %94 = vmatpush1.msra.mxu0 0.0
    %95 = vmatprep.subr.mxu0 0.0
    %96 = vmatpush1.msra.mxu0 0.0
    %97 = vmatprep.subr.mxu0 0.0
    %98 = vmatpush1.msra.mxu0 0.0
    %99 = vmatprep.subr.mxu0 0.0
    %100 = vmatpush1.msra.mxu0 0.0
    %101 = vmatprep.subr.mxu0 0.0
    %102 = vmatpush1.msra.mxu0 0.0
    %103 = vmatprep.subr.mxu0 0.0
    %104 = vmatpush1.msra.mxu0 0.0
    %105 = vmatprep.subr.mxu0 0.0
    %106 = vmatpush1.msra.mxu0 0.0
    %107 = vmatprep.subr.mxu0 0.0
    %108 = vmatpush1.msra.mxu0 0.0
    %109 = vmatprep.subr.mxu0 0.0
    %110 = vmatpush1.msra.mxu0 0.0
    %111 = vmatprep.subr.mxu0 0.0
    %112 = vmatpush1.msra.mxu0 0.0
    %113 = vmatprep.subr.mxu0 0.0
    %114 = vmatpush1.msra.mxu0 0.0
    %115 = vmatprep.subr.mxu0 0.0
    %116 = vmatpush1.msra.mxu0 0.0
    %117 = vmatprep.subr.mxu0 0.0
    %118 = vmatpush1.msra.mxu0 0.0
    %119 = vmatprep.subr.mxu0 0.0
    %120 = vmatpush1.msra.mxu0 0.0
    %121 = vmatprep.subr.mxu0 0.0
    %122 = vmatpush1.msra.mxu0 0.0
    %123 = vmatprep.subr.mxu0 0.0
    %124 = vmatpush1.msra.mxu0 %v91
    %125 = vmatprep.subr.mxu0 0.0
    %126 = vmatpush2.msra.mxu0 0.0
    %127 = vmatprep.subr.mxu0 0.0
    %128 = vmatpush2.msra.mxu0 0.0
    %129 = vmatprep.subr.mxu0 0.0
    %130 = vmatpush2.msra.mxu0 0.0
    %131 = vmatprep.subr.mxu0 0.0
    %132 = vmatpush2.msra.mxu0 0.0
    %133 = vmatprep.subr.mxu0 0.0
    %134 = vmatpush2.msra.mxu0 0.0
    %135 = vmatprep.subr.mxu0 0.0
    %136 = vmatpush2.msra.mxu0 0.0
    %137 = vmatprep.subr.mxu0 0.0
    %138 = vmatpush2.msra.mxu0 0.0
    %139 = vmatprep.subr.mxu0 0.0
    %140 = vmatpush2.msra.mxu0 0.0
    %141 = vmatprep.subr.mxu0 0.0
    %142 = vmatpush2.msra.mxu0 0.0
    %143 = vmatprep.subr.mxu0 0.0
    %144 = vmatpush2.msra.mxu0 0.0
    %145 = vmatprep.subr.mxu0 0.0
    %146 = vmatpush2.msra.mxu0 0.0
    %147 = vmatprep.subr.mxu0 0.0
    %148 = vmatpush2.msra.mxu0 0.0
    %149 = vmatprep.subr.mxu0 0.0
    %150 = vmatpush2.msra.mxu0 0.0
    %151 = vmatprep.subr.mxu0 0.0
    %152 = vmatpush2.msra.mxu0 0.0
    %153 = vmatprep.subr.mxu0 0.0
    %154 = vmatpush2.msra.mxu0 0.0
    %155 = vmatprep.subr.mxu0 0.0
    %156 = vmatpush2.msra.mxu0 0.0
    %157 = vmatprep.mubr.f32.mxu0 0.0
    %158 = vmatmul.mubr.f32.gmra.mxu0 %v87
    %v159 = vpop.f32.mrf.mxu0
    %v160 = vadd.f32 0.0, %v159
    %v161 = vpop.f32.mrf.mxu0
    %162 = vdwg.mxu0
    %v163 = vld [vmem:[%s2] sm:$0x1]
    %v165 = vlaneseq
    %v166 = vshrl.u32 %v165, 7
    %v167 = vsub.s32 0, %v166
    %v168 = vrot.slane %v163, %v167
    %v170 = vadd.f32 %v84, %v168
    %v171 = vadd.f32 %v170, %v160
    %v172 = vmax.f32 %v171, 0.0
    %v173 = vld [vmem:[%s3] sm:$0x1]
    %v175 = vlaneseq
    %v176 = vshrl.u32 %v175, 7
    %v177 = vsub.s32 0, %v176
    %v178 = vrot.slane %v173, %v177
    %v180 = vmul.f32 %v172, %v178
    %v181 = vmul.f32 %v180, 1.442695
    %v182 = vpow.pop %v181
    %v183 = vld [vmem:[#allocation2] sm:$0xff]
    %v184 = vld [vmem:[#allocation2 + $0x8] sm:$0xff]
    %v185 = vld [vmem:[#allocation2 + $0x10] sm:$0xff]
    %v186 = vld [vmem:[#allocation2 + $0x18] sm:$0xff]
    %v187 = vld [vmem:[#allocation2 + $0x20] sm:$0xff]
    %v188 = vld [vmem:[#allocation2 + $0x28] sm:$0xff]
    %v189 = vld [vmem:[#allocation2 + $0x30] sm:$0xff]
    %v190 = vld [vmem:[#allocation2 + $0x38] sm:$0xff]
    %v191 = vld [vmem:[#allocation2 + $0x40] sm:$0xff]
    %v192 = vld [vmem:[#allocation2 + $0x48] sm:$0xff]
    %v193 = vld [vmem:[#allocation2 + $0x50] sm:$0xff]
    %v194 = vld [vmem:[#allocation2 + $0x58] sm:$0xff]
    %v195 = vld [vmem:[#allocation2 + $0x60] sm:$0xff]
    %v196 = vld [vmem:[#allocation2 + $0x68] sm:$0xff]
    %v197 = vld [vmem:[#allocation2 + $0x70] sm:$0xff]
    %v198 = vld [vmem:[#allocation2 + $0x78] sm:$0xff]
    %v199 = vld [vmem:[%s5] sm:$0x1]
    %v201 = vlaneseq
    %v202 = vshrl.u32 %v201, 7
    %v203 = vsub.s32 0, %v202
    %v204 = vrot.slane %v199, %v203
    %206 = vmatprep.subr.mxu0 0.0
    %207 = vmatpush1.msra.mxu0 %v198
    %208 = vmatprep.subr.mxu0 0.0
    %209 = vmatpush1.msra.mxu0 %v197
    %210 = vmatprep.subr.mxu0 0.0
    %211 = vmatpush1.msra.mxu0 %v196
    %212 = vmatprep.subr.mxu0 0.0
    %213 = vmatpush1.msra.mxu0 %v195
    %214 = vmatprep.subr.mxu0 0.0
    %215 = vmatpush1.msra.mxu0 %v194
    %216 = vmatprep.subr.mxu0 0.0
    %217 = vmatpush1.msra.mxu0 %v193
    %218 = vmatprep.subr.mxu0 0.0
    %219 = vmatpush1.msra.mxu0 %v192
    %220 = vmatprep.subr.mxu0 0.0
    %221 = vmatpush1.msra.mxu0 %v191
    %222 = vmatprep.subr.mxu0 0.0
    %223 = vmatpush1.msra.mxu0 %v190
    %224 = vmatprep.subr.mxu0 0.0
    %225 = vmatpush1.msra.mxu0 %v189
    %226 = vmatprep.subr.mxu0 0.0
    %227 = vmatpush1.msra.mxu0 %v188
    %228 = vmatprep.subr.mxu0 0.0
    %229 = vmatpush1.msra.mxu0 %v187
    %230 = vmatprep.subr.mxu0 0.0
    %231 = vmatpush1.msra.mxu0 %v186
    %232 = vmatprep.subr.mxu0 0.0
    %233 = vmatpush1.msra.mxu0 %v185
    %234 = vmatprep.subr.mxu0 0.0
    %235 = vmatpush1.msra.mxu0 %v184
    %236 = vmatprep.subr.mxu0 0.0
    %237 = vmatpush1.msra.mxu0 %v183
    %238 = vmatprep.subr.mxu0 0.0
    %239 = vmatpush2.msra.mxu0 0.0
    %240 = vmatprep.subr.mxu0 0.0
    %241 = vmatpush2.msra.mxu0 0.0
    %242 = vmatprep.subr.mxu0 0.0
    %243 = vmatpush2.msra.mxu0 0.0
    %244 = vmatprep.subr.mxu0 0.0
    %245 = vmatpush2.msra.mxu0 0.0
    %246 = vmatprep.subr.mxu0 0.0
    %247 = vmatpush2.msra.mxu0 0.0
    %248 = vmatprep.subr.mxu0 0.0
    %249 = vmatpush2.msra.mxu0 0.0
    %250 = vmatprep.subr.mxu0 0.0
    %251 = vmatpush2.msra.mxu0 0.0
    %252 = vmatprep.subr.mxu0 0.0
    %253 = vmatpush2.msra.mxu0 0.0
    %254 = vmatprep.subr.mxu0 0.0
    %255 = vmatpush2.msra.mxu0 0.0
    %256 = vmatprep.subr.mxu0 0.0
    %257 = vmatpush2.msra.mxu0 0.0
    %258 = vmatprep.subr.mxu0 0.0
    %259 = vmatpush2.msra.mxu0 0.0
    %260 = vmatprep.subr.mxu0 0.0
    %261 = vmatpush2.msra.mxu0 0.0
    %262 = vmatprep.subr.mxu0 0.0
    %263 = vmatpush2.msra.mxu0 0.0
    %264 = vmatprep.subr.mxu0 0.0
    %265 = vmatpush2.msra.mxu0 0.0
    %266 = vmatprep.subr.mxu0 0.0
    %267 = vmatpush2.msra.mxu0 0.0
    %268 = vmatprep.subr.mxu0 0.0
    %269 = vmatpush2.msra.mxu0 0.0
    %270 = vmatprep.mubr.f32.mxu0 0.0
    %271 = vmatmul.mubr.f32.gmra.mxu0 %v182
    %v272 = vpop.f32.mrf.mxu0
    %v273 = vadd.f32 %v204, %v272
    %v274 = vpop.f32.mrf.mxu0
    %275 = vdwg.mxu0
    %v276 = vmul.f32 %v273, %v273
    %277 = vadd.xlane.f32.xlu0 %v276
    %v278 = vpop.xlane.xlu0 %277
    %v279 = vld [vmem:[#allocation4] sm:$0xff]
    %v280 = vld [vmem:[#allocation4 + $0x8] sm:$0xff]
    %v281 = vld [vmem:[#allocation4 + $0x10] sm:$0xff]
    %v282 = vld [vmem:[#allocation4 + $0x18] sm:$0xff]
    %v283 = vld [vmem:[#allocation4 + $0x20] sm:$0xff]
    %v284 = vld [vmem:[#allocation4 + $0x28] sm:$0xff]
    %v285 = vld [vmem:[#allocation4 + $0x30] sm:$0xff]
    %v286 = vld [vmem:[#allocation4 + $0x38] sm:$0xff]
    %v287 = vld [vmem:[#allocation4 + $0x40] sm:$0xff]
    %v288 = vld [vmem:[#allocation4 + $0x48] sm:$0xff]
    %v289 = vld [vmem:[#allocation4 + $0x50] sm:$0xff]
    %v290 = vld [vmem:[#allocation4 + $0x58] sm:$0xff]
    %v291 = vld [vmem:[#allocation4 + $0x60] sm:$0xff]
    %v292 = vld [vmem:[#allocation4 + $0x68] sm:$0xff]
    %v293 = vld [vmem:[#allocation4 + $0x70] sm:$0xff]
    %v294 = vld [vmem:[#allocation4 + $0x78] sm:$0xff]
    %295 = vmatprep.subr.mxu0 0.0
    %296 = vmatpush1.msra.mxu0 %v294
    %297 = vmatprep.subr.mxu0 0.0
    %298 = vmatpush1.msra.mxu0 %v293
    %299 = vmatprep.subr.mxu0 0.0
    %300 = vmatpush1.msra.mxu0 %v292
    %301 = vmatprep.subr.mxu0 0.0
    %302 = vmatpush1.msra.mxu0 %v291
    %303 = vmatprep.subr.mxu0 0.0
    %304 = vmatpush1.msra.mxu0 %v290
    %305 = vmatprep.subr.mxu0 0.0
    %306 = vmatpush1.msra.mxu0 %v289
    %307 = vmatprep.subr.mxu0 0.0
    %308 = vmatpush1.msra.mxu0 %v288
    %309 = vmatprep.subr.mxu0 0.0
    %310 = vmatpush1.msra.mxu0 %v287
    %311 = vmatprep.subr.mxu0 0.0
    %312 = vmatpush1.msra.mxu0 %v286
    %313 = vmatprep.subr.mxu0 0.0
    %314 = vmatpush1.msra.mxu0 %v285
    %315 = vmatprep.subr.mxu0 0.0
    %316 = vmatpush1.msra.mxu0 %v284
    %317 = vmatprep.subr.mxu0 0.0
    %318 = vmatpush1.msra.mxu0 %v283
    %319 = vmatprep.subr.mxu0 0.0
    %320 = vmatpush1.msra.mxu0 %v282
    %321 = vmatprep.subr.mxu0 0.0
    %322 = vmatpush1.msra.mxu0 %v281
    %323 = vmatprep.subr.mxu0 0.0
    %324 = vmatpush1.msra.mxu0 %v280
    %325 = vmatprep.subr.mxu0 0.0
    %326 = vmatpush1.msra.mxu0 %v279
    %327 = vmatprep.subr.mxu0 0.0
    %328 = vmatpush2.msra.mxu0 0.0
    %329 = vmatprep.subr.mxu0 0.0
    %330 = vmatpush2.msra.mxu0 0.0
    %331 = vmatprep.subr.mxu0 0.0
    %332 = vmatpush2.msra.mxu0 0.0
    %333 = vmatprep.subr.mxu0 0.0
    %334 = vmatpush2.msra.mxu0 0.0
    %335 = vmatprep.subr.mxu0 0.0
    %336 = vmatpush2.msra.mxu0 0.0
    %337 = vmatprep.subr.mxu0 0.0
    %338 = vmatpush2.msra.mxu0 0.0
    %339 = vmatprep.subr.mxu0 0.0
    %340 = vmatpush2.msra.mxu0 0.0
    %341 = vmatprep.subr.mxu0 0.0
    %342 = vmatpush2.msra.mxu0 0.0
    %343 = vmatprep.subr.mxu0 0.0
    %344 = vmatpush2.msra.mxu0 0.0
    %345 = vmatprep.subr.mxu0 0.0
    %346 = vmatpush2.msra.mxu0 0.0
    %347 = vmatprep.subr.mxu0 0.0
    %348 = vmatpush2.msra.mxu0 0.0
    %349 = vmatprep.subr.mxu0 0.0
    %350 = vmatpush2.msra.mxu0 0.0
    %351 = vmatprep.subr.mxu0 0.0
    %352 = vmatpush2.msra.mxu0 0.0
    %353 = vmatprep.subr.mxu0 0.0
    %354 = vmatpush2.msra.mxu0 0.0
    %355 = vmatprep.subr.mxu0 0.0
    %356 = vmatpush2.msra.mxu0 0.0
    %357 = vmatprep.subr.mxu0 0.0
    %358 = vmatpush2.msra.mxu0 0.0
    %359 = vmatprep.mubr.f32.mxu0 0.0
    %360 = vmatmul.mubr.f32.gmra.mxu0 %v273
    %v361 = vpop.f32.mrf.mxu0
    %v362 = vadd.f32 0.0, %v361
    %v363 = vpop.f32.mrf.mxu0
    %364 = vdwg.mxu0
    %v365 = vld [vmem:[%s7] sm:$0x1]
    %v367 = vlaneseq
    %v368 = vshrl.u32 %v367, 7
    %v369 = vsub.s32 0, %v368
    %v370 = vrot.slane %v365, %v369
    %v372 = vadd.f32 %v278, %v370
    %v373 = vadd.f32 %v372, %v362
    %v374 = vmax.f32 %v373, 0.0
    %v375 = vld [vmem:[%s8] sm:$0x1]
    %v377 = vlaneseq
    %v378 = vshrl.u32 %v377, 7
    %v379 = vsub.s32 0, %v378
    %v380 = vrot.slane %v375, %v379
    %v382 = vmul.f32 %v374, %v380
    %v383 = vmul.f32 %v382, 1.442695
    %v384 = vpow.pop %v383
    %v385 = vld [vmem:[#allocation6] sm:$0xff]
    %v386 = vld [vmem:[#allocation6 + $0x8] sm:$0xff]
    %v387 = vld [vmem:[#allocation6 + $0x10] sm:$0xff]
    %v388 = vld [vmem:[#allocation6 + $0x18] sm:$0xff]
    %v389 = vld [vmem:[#allocation6 + $0x20] sm:$0xff]
    %v390 = vld [vmem:[#allocation6 + $0x28] sm:$0xff]
    %v391 = vld [vmem:[#allocation6 + $0x30] sm:$0xff]
    %v392 = vld [vmem:[#allocation6 + $0x38] sm:$0xff]
    %v393 = vld [vmem:[#allocation6 + $0x40] sm:$0xff]
    %v394 = vld [vmem:[#allocation6 + $0x48] sm:$0xff]
    %v395 = vld [vmem:[#allocation6 + $0x50] sm:$0xff]
    %v396 = vld [vmem:[#allocation6 + $0x58] sm:$0xff]
    %v397 = vld [vmem:[#allocation6 + $0x60] sm:$0xff]
    %v398 = vld [vmem:[#allocation6 + $0x68] sm:$0xff]
    %v399 = vld [vmem:[#allocation6 + $0x70] sm:$0xff]
    %v400 = vld [vmem:[#allocation6 + $0x78] sm:$0xff]
    %v401 = vld [vmem:[%s10] sm:$0x1]
    %v403 = vlaneseq
    %v404 = vshrl.u32 %v403, 7
    %v405 = vsub.s32 0, %v404
    %v406 = vrot.slane %v401, %v405
    %408 = vmatprep.subr.mxu0 0.0
    %409 = vmatpush1.msra.mxu0 %v400
    %410 = vmatprep.subr.mxu0 0.0
    %411 = vmatpush1.msra.mxu0 %v399
    %412 = vmatprep.subr.mxu0 0.0
    %413 = vmatpush1.msra.mxu0 %v398
    %414 = vmatprep.subr.mxu0 0.0
    %415 = vmatpush1.msra.mxu0 %v397
    %416 = vmatprep.subr.mxu0 0.0
    %417 = vmatpush1.msra.mxu0 %v396
    %418 = vmatprep.subr.mxu0 0.0
    %419 = vmatpush1.msra.mxu0 %v395
    %420 = vmatprep.subr.mxu0 0.0
    %421 = vmatpush1.msra.mxu0 %v394
    %422 = vmatprep.subr.mxu0 0.0
    %423 = vmatpush1.msra.mxu0 %v393
    %424 = vmatprep.subr.mxu0 0.0
    %425 = vmatpush1.msra.mxu0 %v392
    %426 = vmatprep.subr.mxu0 0.0
    %427 = vmatpush1.msra.mxu0 %v391
    %428 = vmatprep.subr.mxu0 0.0
    %429 = vmatpush1.msra.mxu0 %v390
    %430 = vmatprep.subr.mxu0 0.0
    %431 = vmatpush1.msra.mxu0 %v389
    %432 = vmatprep.subr.mxu0 0.0
    %433 = vmatpush1.msra.mxu0 %v388
    %434 = vmatprep.subr.mxu0 0.0
    %435 = vmatpush1.msra.mxu0 %v387
    %436 = vmatprep.subr.mxu0 0.0
    %437 = vmatpush1.msra.mxu0 %v386
    %438 = vmatprep.subr.mxu0 0.0
    %439 = vmatpush1.msra.mxu0 %v385
    %440 = vmatprep.subr.mxu0 0.0
    %441 = vmatpush2.msra.mxu0 0.0
    %442 = vmatprep.subr.mxu0 0.0
    %443 = vmatpush2.msra.mxu0 0.0
    %444 = vmatprep.subr.mxu0 0.0
    %445 = vmatpush2.msra.mxu0 0.0
    %446 = vmatprep.subr.mxu0 0.0
    %447 = vmatpush2.msra.mxu0 0.0
    %448 = vmatprep.subr.mxu0 0.0
    %449 = vmatpush2.msra.mxu0 0.0
    %450 = vmatprep.subr.mxu0 0.0
    %451 = vmatpush2.msra.mxu0 0.0
    %452 = vmatprep.subr.mxu0 0.0
    %453 = vmatpush2.msra.mxu0 0.0
    %454 = vmatprep.subr.mxu0 0.0
    %455 = vmatpush2.msra.mxu0 0.0
    %456 = vmatprep.subr.mxu0 0.0
    %457 = vmatpush2.msra.mxu0 0.0
    %458 = vmatprep.subr.mxu0 0.0
    %459 = vmatpush2.msra.mxu0 0.0
    %460 = vmatprep.subr.mxu0 0.0
    %461 = vmatpush2.msra.mxu0 0.0
    %462 = vmatprep.subr.mxu0 0.0
    %463 = vmatpush2.msra.mxu0 0.0
    %464 = vmatprep.subr.mxu0 0.0
    %465 = vmatpush2.msra.mxu0 0.0
    %466 = vmatprep.subr.mxu0 0.0
    %467 = vmatpush2.msra.mxu0 0.0
    %468 = vmatprep.subr.mxu0 0.0
    %469 = vmatpush2.msra.mxu0 0.0
    %470 = vmatprep.subr.mxu0 0.0
    %471 = vmatpush2.msra.mxu0 0.0
    %472 = vmatprep.mubr.f32.mxu0 0.0
    %473 = vmatmul.mubr.f32.gmra.mxu0 %v384
    %v474 = vpop.f32.mrf.mxu0
    %v475 = vadd.f32 %v406, %v474
    %v476 = vpop.f32.mrf.mxu0
    %477 = vdwg.mxu0
    %478 = vst [vmem:[%s11] sm:$0xff] %v475
    // Predicated region
    $region58: #{forward.1} parent=1 // pred_check
      _
    $region59: #{forward.1} parent=1 // pred_check_branch
      %480 = sbr.rel (0) target = $region61
    $region60: #{forward.1} parent=1 // pred_region
      _
    $region61: #{forward.1} parent=1 // pred_fallthru
      _
    // Predicated region
    $region62: #{forward.1} parent=1 // pred_check
      _
    $region63: #{forward.1} parent=1 // pred_check_branch
      %482 = sbr.rel (0) target = $region65
    $region64: #{forward.1} parent=1 // pred_region
      _
    $region65: #{forward.1} parent=1 // pred_fallthru
      _
    %483 = vsyncpa [#allocation3], 1
    %484 = vsyncpa [#allocation5], 1

</llo_original>
